<compile_context>
chip_gen: v5e
topology: v5e:2x2
jax: 0.10.0
libtpu: 0.0.40
codegen_flags: <defaults>
</compile_context>

<pallas_src>
import functools

import jax
import jax.numpy as jnp
from jax.experimental import pallas as pl
from jax.experimental.pallas import tpu as pltpu

NUM_INPUTS = 80
NUM_LABELS = 17
H1, H2, H3 = 256, 256, 128


def _round_up(n, m):
    return ((n + m - 1) // m) * m


def _mlp_kernel(x_ref, w1_ref, b1_ref, w2_ref, b2_ref, w3_ref, b3_ref,
                w4_ref, b4_ref, o_ref):
    """Fused 4-layer MLP over one batch tile.

    Weights are bf16 (MXU-native); accumulation, bias add and ReLU stay f32.
    Weights/biases use constant index_maps so they stay VMEM-resident across
    grid steps; only the x / logits tiles stream through HBM.
    """
    h = x_ref[...].astype(jnp.bfloat16)

    h = jnp.dot(h, w1_ref[...], preferred_element_type=jnp.float32) + b1_ref[...]
    h = jnp.maximum(h, 0.0)                                   # ReLU (dropout = id)

    h = jnp.dot(h.astype(jnp.bfloat16), w2_ref[...],
                preferred_element_type=jnp.float32) + b2_ref[...]
    h = jnp.maximum(h, 0.0)

    h = jnp.dot(h.astype(jnp.bfloat16), w3_ref[...],
                preferred_element_type=jnp.float32) + b3_ref[...]
    h = jnp.maximum(h, 0.0)

    out = jnp.dot(h.astype(jnp.bfloat16), w4_ref[...],
                  preferred_element_type=jnp.float32) + b4_ref[...]
    o_ref[...] = out.astype(o_ref.dtype)


def init_params(key):
    """Init mimicking torch.nn.Linear default (U[-1/sqrt(fan_in), +bound])."""
    dims = [(NUM_INPUTS, H1), (H1, H2), (H2, H3), (H3, NUM_LABELS)]
    params = []
    for fan_in, fan_out in dims:
        key, kw, kb = jax.random.split(key, 3)
        bound = 1.0 / jnp.sqrt(fan_in)
        w = jax.random.uniform(kw, (fan_in, fan_out), jnp.float32, -bound, bound)
        b = jax.random.uniform(kb, (fan_out,), jnp.float32, -bound, bound)
        params.append((w, b))
    return params


def prepare_params(params):
    """One-time parameter prep (hoisted out of the forward pass):
    bf16 weights for the MXU, (1, H) f32 biases."""
    return tuple((w.astype(jnp.bfloat16), b.reshape(1, -1).astype(jnp.float32))
                 for (w, b) in params)


@functools.partial(jax.jit, static_argnames=("tb",))
def _forward_impl(x, w1, b1, w2, b2, w3, b3, w4, b4, *, tb):
    batch = x.shape[0]
    bp = _round_up(batch, tb)
    if bp != batch:                       # row-pad only; no feature padding
        x = jnp.pad(x, ((0, bp - batch), (0, 0)))

    grid = (bp // tb,)

    flops = 2 * bp * (NUM_INPUTS * H1 + H1 * H2 + H2 * H3 + H3 * NUM_LABELS)
    bytes_accessed = (
        bp * (NUM_INPUTS + NUM_LABELS) * 4                   # x in + logits out (f32)
        + 2 * (w1.size + w2.size + w3.size + w4.size)        # bf16 weights
        + 4 * (b1.size + b2.size + b3.size + b4.size))       # f32 biases

    def const(shape):
        return pl.BlockSpec(shape, lambda i: (0, 0))

    out = pl.pallas_call(
        _mlp_kernel,
        out_shape=jax.ShapeDtypeStruct((bp, NUM_LABELS), jnp.float32),
        grid=grid,
        in_specs=[
            pl.BlockSpec((tb, NUM_INPUTS), lambda i: (i, 0)),  # stream x tiles
            const((NUM_INPUTS, H1)), const((1, H1)),
            const((H1, H2)), const((1, H2)),
            const((H2, H3)), const((1, H3)),
            const((H3, NUM_LABELS)), const((1, NUM_LABELS)),
        ],
        out_specs=pl.BlockSpec((tb, NUM_LABELS), lambda i: (i, 0)),
        compiler_params=pltpu.CompilerParams(
            dimension_semantics=("parallel",)),
        cost_estimate=pl.CostEstimate(
            flops=flops, transcendentals=0, bytes_accessed=bytes_accessed),
    )(x, w1, b1, w2, b2, w3, b3, w4, b4)

    if bp != batch:
        out = out[:batch]
    return out


def classifier_forward(x, prepped_params, tb=512):
    """x: (batch, 80) float32 -> logits (batch, 17) float32."""
    batch = x.shape[0]
    tb = min(tb, _round_up(max(batch, 1), 8))   # small batches stay one tile
    flat = [t for pair in prepped_params for t in pair]
    return _forward_impl(x, *flat, tb=tb)


def _reference_forward(x, prepped_params):
    """Pure-JAX reference mirroring the kernel's bf16-operand / f32-accum math."""
    h = x
    for i, (w, b) in enumerate(prepped_params):
        h = jnp.dot(h.astype(jnp.bfloat16), w,
                    preferred_element_type=jnp.float32) + b
        if i < 3:
            h = jnp.maximum(h, 0.0)
    return h


if __name__ == "__main__":
    key = jax.random.PRNGKey(0)
    key_x, key_x2, key_p = jax.random.split(key, 3)

    params = init_params(key_p)
    prepped = prepare_params(params)

    # Small demo batch.
    batch = 8
    x = jax.random.normal(key_x, (batch, NUM_INPUTS), jnp.float32)
    logits = classifier_forward(x, prepped)
    jax.block_until_ready(logits)
    ref = _reference_forward(x, prepped)
    assert logits.shape == (batch, NUM_LABELS), logits.shape
    assert jnp.allclose(logits, ref, atol=5e-3, rtol=5e-3), (
        float(jnp.max(jnp.abs(logits - ref))))

    # Exercise a multi-tile grid + batch row padding.
    batch2 = 300
    x2 = jax.random.normal(key_x2, (batch2, NUM_INPUTS), jnp.float32)
    logits2 = classifier_forward(x2, prepped, tb=128)
    jax.block_until_ready(logits2)
    ref2 = _reference_forward(x2, prepped)
    assert logits2.shape == (batch2, NUM_LABELS), logits2.shape
    assert jnp.allclose(logits2, ref2, atol=5e-3, rtol=5e-3), (
        float(jnp.max(jnp.abs(logits2 - ref2))))

    print("KERNEL_OK")
</pallas_src>

<mosaic_0001>
module attributes {stable_mosaic.version = 11 : i64} {
  func.func @_mlp_kernel(%arg0: i32, %arg1: memref<8x80xf32, #tpu.memory_space<vmem>>, %arg2: memref<80x256xbf16, #tpu.memory_space<vmem>>, %arg3: memref<1x256xf32, #tpu.memory_space<vmem>>, %arg4: memref<256x256xbf16, #tpu.memory_space<vmem>>, %arg5: memref<1x256xf32, #tpu.memory_space<vmem>>, %arg6: memref<256x128xbf16, #tpu.memory_space<vmem>>, %arg7: memref<1x128xf32, #tpu.memory_space<vmem>>, %arg8: memref<128x17xbf16, #tpu.memory_space<vmem>>, %arg9: memref<1x17xf32, #tpu.memory_space<vmem>>, %arg10: memref<8x17xf32, #tpu.memory_space<vmem>>) attributes {dimension_semantics = [#tpu.dimension_semantics<parallel>], iteration_bounds = array<i64: 1>, scalar_prefetch = 0 : i64, scratch_operands = 0 : i64, tpu.core_type = #tpu.core_type<tc>, window_params = [{transform_indices = @transform_0, window_bounds = array<i64: 8, 80>}, {pipeline_mode = #tpu.pipeline_mode<synchronous>, transform_indices = @transform_1, window_bounds = array<i64: 80, 256>}, {pipeline_mode = #tpu.pipeline_mode<synchronous>, transform_indices = @transform_2, window_bounds = array<i64: 1, 256>}, {pipeline_mode = #tpu.pipeline_mode<synchronous>, transform_indices = @transform_3, window_bounds = array<i64: 256, 256>}, {pipeline_mode = #tpu.pipeline_mode<synchronous>, transform_indices = @transform_4, window_bounds = array<i64: 1, 256>}, {pipeline_mode = #tpu.pipeline_mode<synchronous>, transform_indices = @transform_5, window_bounds = array<i64: 256, 128>}, {pipeline_mode = #tpu.pipeline_mode<synchronous>, transform_indices = @transform_6, window_bounds = array<i64: 1, 128>}, {pipeline_mode = #tpu.pipeline_mode<synchronous>, transform_indices = @transform_7, window_bounds = array<i64: 128, 17>}, {pipeline_mode = #tpu.pipeline_mode<synchronous>, transform_indices = @transform_8, window_bounds = array<i64: 1, 17>}, {transform_indices = @transform_9, window_bounds = array<i64: 8, 17>}]} {
    %c0 = arith.constant 0 : index
    %c0_0 = arith.constant 0 : index
    %0 = vector.load %arg1[%c0, %c0_0] : memref<8x80xf32, #tpu.memory_space<vmem>>, vector<8x80xf32>
    %1 = arith.truncf %0 : vector<8x80xf32> to vector<8x80xbf16>
    %c0_1 = arith.constant 0 : index
    %c0_2 = arith.constant 0 : index
    %2 = vector.load %arg2[%c0_1, %c0_2] : memref<80x256xbf16, #tpu.memory_space<vmem>>, vector<80x256xbf16>
    %cst = arith.constant dense<0.000000e+00> : vector<8x256xf32>
    %3 = tpu.matmul %1, %2, %cst {dimension_numbers = #tpu.dot_dimension_numbers<[1], [0], [0], [1], [0, 0, 1, 1], [], []>} : vector<8x80xbf16>, vector<80x256xbf16>, vector<8x256xf32> -> vector<8x256xf32>
    %c0_3 = arith.constant 0 : index
    %c0_4 = arith.constant 0 : index
    %4 = vector.load %arg3[%c0_3, %c0_4] : memref<1x256xf32, #tpu.memory_space<vmem>>, vector<1x256xf32>
    %5 = vector.broadcast %4 : vector<1x256xf32> to vector<8x256xf32>
    %6 = arith.addf %3, %5 : vector<8x256xf32>
    %cst_5 = arith.constant 0.000000e+00 : f32
    %7 = vector.broadcast %cst_5 : f32 to vector<8x256xf32>
    %8 = arith.maximumf %6, %7 : vector<8x256xf32>
    %9 = arith.truncf %8 : vector<8x256xf32> to vector<8x256xbf16>
    %c0_6 = arith.constant 0 : index
    %c0_7 = arith.constant 0 : index
    %10 = vector.load %arg4[%c0_6, %c0_7] : memref<256x256xbf16, #tpu.memory_space<vmem>>, vector<256x256xbf16>
    %cst_8 = arith.constant dense<0.000000e+00> : vector<8x256xf32>
    %11 = tpu.matmul %9, %10, %cst_8 {dimension_numbers = #tpu.dot_dimension_numbers<[1], [0], [0], [1], [0, 0, 1, 1], [], []>} : vector<8x256xbf16>, vector<256x256xbf16>, vector<8x256xf32> -> vector<8x256xf32>
    %c0_9 = arith.constant 0 : index
    %c0_10 = arith.constant 0 : index
    %12 = vector.load %arg5[%c0_9, %c0_10] : memref<1x256xf32, #tpu.memory_space<vmem>>, vector<1x256xf32>
    %13 = vector.broadcast %12 : vector<1x256xf32> to vector<8x256xf32>
    %14 = arith.addf %11, %13 : vector<8x256xf32>
    %cst_11 = arith.constant 0.000000e+00 : f32
    %15 = vector.broadcast %cst_11 : f32 to vector<8x256xf32>
    %16 = arith.maximumf %14, %15 : vector<8x256xf32>
    %17 = arith.truncf %16 : vector<8x256xf32> to vector<8x256xbf16>
    %c0_12 = arith.constant 0 : index
    %c0_13 = arith.constant 0 : index
    %18 = vector.load %arg6[%c0_12, %c0_13] : memref<256x128xbf16, #tpu.memory_space<vmem>>, vector<256x128xbf16>
    %cst_14 = arith.constant dense<0.000000e+00> : vector<8x128xf32>
    %19 = tpu.matmul %17, %18, %cst_14 {dimension_numbers = #tpu.dot_dimension_numbers<[1], [0], [0], [1], [0, 0, 1, 1], [], []>} : vector<8x256xbf16>, vector<256x128xbf16>, vector<8x128xf32> -> vector<8x128xf32>
    %c0_15 = arith.constant 0 : index
    %c0_16 = arith.constant 0 : index
    %20 = vector.load %arg7[%c0_15, %c0_16] : memref<1x128xf32, #tpu.memory_space<vmem>>, vector<1x128xf32>
    %21 = vector.broadcast %20 : vector<1x128xf32> to vector<8x128xf32>
    %22 = arith.addf %19, %21 : vector<8x128xf32>
    %cst_17 = arith.constant 0.000000e+00 : f32
    %23 = vector.broadcast %cst_17 : f32 to vector<8x128xf32>
    %24 = arith.maximumf %22, %23 : vector<8x128xf32>
    %25 = arith.truncf %24 : vector<8x128xf32> to vector<8x128xbf16>
    %c0_18 = arith.constant 0 : index
    %c0_19 = arith.constant 0 : index
    %26 = vector.load %arg8[%c0_18, %c0_19] : memref<128x17xbf16, #tpu.memory_space<vmem>>, vector<128x17xbf16>
    %cst_20 = arith.constant dense<0.000000e+00> : vector<8x17xf32>
    %27 = tpu.matmul %25, %26, %cst_20 {dimension_numbers = #tpu.dot_dimension_numbers<[1], [0], [0], [1], [0, 0, 1, 1], [], []>} : vector<8x128xbf16>, vector<128x17xbf16>, vector<8x17xf32> -> vector<8x17xf32>
    %c0_21 = arith.constant 0 : index
    %c0_22 = arith.constant 0 : index
    %28 = vector.load %arg9[%c0_21, %c0_22] : memref<1x17xf32, #tpu.memory_space<vmem>>, vector<1x17xf32>
    %29 = vector.broadcast %28 : vector<1x17xf32> to vector<8x17xf32>
    %30 = arith.addf %27, %29 : vector<8x17xf32>
    %c0_23 = arith.constant 0 : index
    %c0_24 = arith.constant 0 : index
    %31 = vector.load %arg10[%c0_23, %c0_24] : memref<8x17xf32, #tpu.memory_space<vmem>>, vector<8x17xf32>
    tpu.vector_store %arg10[%c0_23, %c0_24], %30 {strides = array<i32>} : memref<8x17xf32, #tpu.memory_space<vmem>>, vector<8x17xf32>,
    return
  }
  func.func @transform_0(%arg0: i32) -> (i32, i32) {
    %c0_i32 = arith.constant 0 : i32
    %c0_i32_0 = arith.constant 0 : i32
    return %arg0, %c0_i32 : i32, i32
  }
  func.func @transform_1(%arg0: i32) -> (i32, i32) {
    %c0_i32 = arith.constant 0 : i32
    %c0_i32_0 = arith.constant 0 : i32
    %c0_i32_1 = arith.constant 0 : i32
    return %c0_i32, %c0_i32_0 : i32, i32
  }
  func.func @transform_2(%arg0: i32) -> (i32, i32) {
    %c0_i32 = arith.constant 0 : i32
    %c0_i32_0 = arith.constant 0 : i32
    %c0_i32_1 = arith.constant 0 : i32
    return %c0_i32, %c0_i32_0 : i32, i32
  }
  func.func @transform_3(%arg0: i32) -> (i32, i32) {
    %c0_i32 = arith.constant 0 : i32
    %c0_i32_0 = arith.constant 0 : i32
    %c0_i32_1 = arith.constant 0 : i32
    return %c0_i32, %c0_i32_0 : i32, i32
  }
  func.func @transform_4(%arg0: i32) -> (i32, i32) {
    %c0_i32 = arith.constant 0 : i32
    %c0_i32_0 = arith.constant 0 : i32
    %c0_i32_1 = arith.constant 0 : i32
    return %c0_i32, %c0_i32_0 : i32, i32
  }
  func.func @transform_5(%arg0: i32) -> (i32, i32) {
    %c0_i32 = arith.constant 0 : i32
    %c0_i32_0 = arith.constant 0 : i32
    %c0_i32_1 = arith.constant 0 : i32
    return %c0_i32, %c0_i32_0 : i32, i32
  }
  func.func @transform_6(%arg0: i32) -> (i32, i32) {
    %c0_i32 = arith.constant 0 : i32
    %c0_i32_0 = arith.constant 0 : i32
    %c0_i32_1 = arith.constant 0 : i32
    return %c0_i32, %c0_i32_0 : i32, i32
  }
  func.func @transform_7(%arg0: i32) -> (i32, i32) {
    %c0_i32 = arith.constant 0 : i32
    %c0_i32_0 = arith.constant 0 : i32
    %c0_i32_1 = arith.constant 0 : i32
    return %c0_i32, %c0_i32_0 : i32, i32
  }
  func.func @transform_8(%arg0: i32) -> (i32, i32) {
    %c0_i32 = arith.constant 0 : i32
    %c0_i32_0 = arith.constant 0 : i32
    %c0_i32_1 = arith.constant 0 : i32
    return %c0_i32, %c0_i32_0 : i32, i32
  }
  func.func @transform_9(%arg0: i32) -> (i32, i32) {
    %c0_i32 = arith.constant 0 : i32
    %c0_i32_0 = arith.constant 0 : i32
    return %arg0, %c0_i32 : i32, i32
  }
}

</mosaic_0001>

<llo_original>
// kernel: _forward_impl.1
$region0: #{_forward_impl.1}
  #allocation0 [shape = 'u32[]', space=smem, size = 0x4, offset = 0x4, fixed_abs, tag = 'smem constant byte address 0x4 - core index']
  #allocation1 [shape = 'u32[72,128]{1,0:T(1,128)}', space=vmem, size = 0x9000, scoped, tag = 'internal scratch']
  %s0 = inlined_call_operand.vmem [shape: f32[8,80], index: 0, kind: input, shape index: {}]
  %s1 = inlined_call_operand.hbm [shape: bf16[80,256], index: 1, kind: input, shape index: {}]
  %s2 = inlined_call_operand.vmem [shape: f32[1,256], index: 2, kind: input, shape index: {}]
  %s3 = inlined_call_operand.hbm [shape: bf16[256,256], index: 3, kind: input, shape index: {}]
  %s4 = inlined_call_operand.vmem [shape: f32[1,256], index: 4, kind: input, shape index: {}]
  %s5 = inlined_call_operand.hbm [shape: bf16[256,128], index: 5, kind: input, shape index: {}]
  %s6 = inlined_call_operand.vmem [shape: f32[1,128], index: 6, kind: input, shape index: {}]
  %s7 = inlined_call_operand.vmem [shape: bf16[128,17], index: 7, kind: input, shape index: {}]
  %s8 = inlined_call_operand.vmem [shape: f32[1,17], index: 8, kind: input, shape index: {}]
  %s9 = inlined_call_operand.hbm [shape: f32[8,17], index: 9, kind: output, shape index: {}]
  %s10 = sld [smem:[#allocation0]]
  $region58: #{_forward_impl.1} parent=0
    _
  %s12 = ssub.s32 1, %s10
  %s13 = scalar_select 0, %s12, %s10
  $region1: #{_forward_impl.1} parent=0
    #allocation2 [shape = 'u8[40960]{0}', space=vmem, size = 0xa000, scoped, tag = 'input window, operand 1, single buffered']
    #allocation3 [shape = 's32[1]{0}', space=sflag, size = 0x4, scoped, tag = 'scoped memory for _forward_impl.1']
    #allocation4 [shape = 's32[1]{0}', space=sflag, size = 0x4, scoped, tag = 'scoped memory for _forward_impl.1']
    #allocation5 [shape = 'u8[131072]{0}', space=vmem, size = 0x20000, scoped, tag = 'input window, operand 3, single buffered']
    #allocation6 [shape = 's32[1]{0}', space=sflag, size = 0x4, scoped, tag = 'scoped memory for _forward_impl.1']
    #allocation7 [shape = 'u8[65536]{0}', space=vmem, size = 0x10000, scoped, tag = 'input window, operand 5, single buffered']
    #allocation8 [shape = 'u8[4096]{0}', space=vmem, size = 0x1000, scoped, tag = 'output window, operand 0, single buffered']
    %14 = vsyncpa [#allocation3], 0
    %15 = vsyncpa [#allocation6], 0
    %16 = vsyncpa [#allocation4], 0
    // Predicated region
    $region2: #{_forward_impl.1} parent=1 // pred_check
      _
    $region3: #{_forward_impl.1} parent=1 // pred_check_branch
      %18 = sbr.rel (0) target = $region5
    $region4: #{_forward_impl.1} parent=1 // pred_region
      _
    $region5: #{_forward_impl.1} parent=1 // pred_fallthru
      _
    // Predicated region
    $region6: #{_forward_impl.1} parent=1 // pred_check
      _
    $region7: #{_forward_impl.1} parent=1 // pred_check_branch
      %20 = sbr.rel (0) target = $region9
    $region8: #{_forward_impl.1} parent=1 // pred_region
      %22 = vsyncadd [#allocation3], 0
      %s23 = sshll.u32 %s1, 4
      %s24 = int_to_ptr.hbm [resolvable:$true] %s23
      %s25 = sshll.u32 [#allocation2], 4
      %s26 = int_to_ptr.vmem [resolvable:$true] %s25
      %31 = dma.hbm_to_vmem [thread:$0]  %s24, 1280, %s26, [#allocation3], 128, 128, 8
    $region9: #{_forward_impl.1} parent=1 // pred_fallthru
      _
    // Predicated region
    $region10: #{_forward_impl.1} parent=1 // pred_check
      _
    $region11: #{_forward_impl.1} parent=1 // pred_check_branch
      %33 = sbr.rel (0) target = $region13
    $region12: #{_forward_impl.1} parent=1 // pred_region
      _
    $region13: #{_forward_impl.1} parent=1 // pred_fallthru
      _
    // Predicated region
    $region14: #{_forward_impl.1} parent=1 // pred_check
      _
    $region15: #{_forward_impl.1} parent=1 // pred_check_branch
      %35 = sbr.rel (0) target = $region17
    $region16: #{_forward_impl.1} parent=1 // pred_region
      %37 = vsyncadd [#allocation6], 0
      %s38 = sshll.u32 %s3, 4
      %s39 = int_to_ptr.hbm [resolvable:$true] %s38
      %s40 = sshll.u32 [#allocation5], 4
      %s41 = int_to_ptr.vmem [resolvable:$true] %s40
      %46 = dma.hbm_to_vmem [thread:$0]  %s39, 4096, %s41, [#allocation6], 128, 128, 8
    $region17: #{_forward_impl.1} parent=1 // pred_fallthru
      _
    // Predicated region
    $region18: #{_forward_impl.1} parent=1 // pred_check
      _
    $region19: #{_forward_impl.1} parent=1 // pred_check_branch
      %48 = sbr.rel (0) target = $region21
    $region20: #{_forward_impl.1} parent=1 // pred_region
      _
    $region21: #{_forward_impl.1} parent=1 // pred_fallthru
      _
    // Predicated region
    $region22: #{_forward_impl.1} parent=1 // pred_check
      _
    $region23: #{_forward_impl.1} parent=1 // pred_check_branch
      %50 = sbr.rel (0) target = $region25
    $region24: #{_forward_impl.1} parent=1 // pred_region
      %52 = vsyncadd [#allocation6], 0
      %s53 = sshll.u32 %s5, 4
      %s54 = int_to_ptr.hbm [resolvable:$true] %s53
      %s55 = sshll.u32 [#allocation7], 4
      %s56 = int_to_ptr.vmem [resolvable:$true] %s55
      %61 = dma.hbm_to_vmem [thread:$0]  %s54, 2048, %s56, [#allocation6], 64, 64, 4
    $region25: #{_forward_impl.1} parent=1 // pred_fallthru
      _
    // Predicated region
    $region26: #{_forward_impl.1} parent=1 // pred_check
      _
    $region27: #{_forward_impl.1} parent=1 // pred_check_branch
      %63 = sbr.rel (0) target = $region29
    $region28: #{_forward_impl.1} parent=1 // pred_region
      _
    $region29: #{_forward_impl.1} parent=1 // pred_fallthru
      _
    // Predicated region
    $region30: #{_forward_impl.1} parent=1 // pred_check
      _
    $region31: #{_forward_impl.1} parent=1 // pred_check_branch
      %65 = sbr.rel (0) target = $region33
    $region32: #{_forward_impl.1} parent=1 // pred_region
      _
    $region33: #{_forward_impl.1} parent=1 // pred_fallthru
      _
    // Predicated region
    $region34: #{_forward_impl.1} parent=1 // pred_check
      _
    $region35: #{_forward_impl.1} parent=1 // pred_check_branch
      %67 = sbr.rel (0) target = $region37
    $region36: #{_forward_impl.1} parent=1 // pred_region
      _
    $region37: #{_forward_impl.1} parent=1 // pred_fallthru
      _
    // Predicated region
    $region38: #{_forward_impl.1} parent=1 // pred_check
      _
    $region39: #{_forward_impl.1} parent=1 // pred_check_branch
      %69 = sbr.rel (0) target = $region41
    $region40: #{_forward_impl.1} parent=1 // pred_region
      %71 = dma.done [#allocation3], 1280
    $region41: #{_forward_impl.1} parent=1 // pred_fallthru
      _
    // Predicated region
    $region42: #{_forward_impl.1} parent=1 // pred_check
      _
    $region43: #{_forward_impl.1} parent=1 // pred_check_branch
      %73 = sbr.rel (0) target = $region45
    $region44: #{_forward_impl.1} parent=1 // pred_region
      %75 = dma.done [#allocation6], 4096
    $region45: #{_forward_impl.1} parent=1 // pred_fallthru
      _
    // Predicated region
    $region46: #{_forward_impl.1} parent=1 // pred_check
      _
    $region47: #{_forward_impl.1} parent=1 // pred_check_branch
      %77 = sbr.rel (0) target = $region49
    $region48: #{_forward_impl.1} parent=1 // pred_region
      %79 = dma.done [#allocation6], 2048
    $region49: #{_forward_impl.1} parent=1 // pred_fallthru
      _
    %v81 = vld [vmem:[%s0] sm:$0xff]
    %v82 = vpack.c.bf16 %v81, %v81
    %v83 = vld [vmem:[#allocation2] sm:$0xff]
    %v84 = vld [vmem:[#allocation2 + $0x8] sm:$0xff]
    %v85 = vld [vmem:[#allocation2 + $0x10] sm:$0xff]
    %v86 = vld [vmem:[#allocation2 + $0x18] sm:$0xff]
    %v87 = vld [vmem:[#allocation2 + $0x20] sm:$0xff]
    %v88 = vld [vmem:[#allocation2 + $0x28] sm:$0xff]
    %v89 = vld [vmem:[#allocation2 + $0x30] sm:$0xff]
    %v90 = vld [vmem:[#allocation2 + $0x38] sm:$0xff]
    %v91 = vld [vmem:[#allocation2 + $0x40] sm:$0xff]
    %v92 = vld [vmem:[#allocation2 + $0x48] sm:$0xff]
    %v93 = vld [vmem:[%s2] sm:$0x3]
    %v95 = vperm.slane %v93, 0
    %v96 = vperm.slane %v93, 1
    %v109 = vunpack.c.l.b16 %v83
    %v110 = vunpack.c.h.b16 %v83
    %v111 = vunpack.c.l.b16 %v84
    %v112 = vunpack.c.h.b16 %v84
    %v113 = vunpack.c.l.b16 %v85
    %v114 = vunpack.c.h.b16 %v85
    %v115 = vunpack.c.l.b16 %v86
    %v116 = vunpack.c.h.b16 %v86
    %v117 = vunpack.c.l.b16 %v87
    %v118 = vunpack.c.h.b16 %v87
    %v119 = vunpack.c.l.b16 %v88
    %v120 = vunpack.c.h.b16 %v88
    %v121 = vunpack.c.l.b16 %v89
    %v122 = vunpack.c.h.b16 %v89
    %v123 = vunpack.c.l.b16 %v90
    %v124 = vunpack.c.h.b16 %v90
    %v125 = vunpack.c.l.b16 %v91
    %v126 = vunpack.c.h.b16 %v91
    %v127 = vunpack.c.l.b16 %v92
    %v128 = vunpack.c.h.b16 %v92
    %v129 = vpack.c.b16 %v111, %v109
    %v130 = vpack.c.b16 %v112, %v110
    %v131 = vpack.c.b16 %v115, %v113
    %v132 = vpack.c.b16 %v116, %v114
    %v133 = vpack.c.b16 %v119, %v117
    %v134 = vpack.c.b16 %v120, %v118
    %v135 = vpack.c.b16 %v123, %v121
    %v136 = vpack.c.b16 %v124, %v122
    %v137 = vpack.c.b16 %v127, %v125
    %v138 = vpack.c.b16 %v128, %v126
    %vm149 = vcmask 654336
    %v151 = vsel %vm149, %v82, 0
    %153 = vmatpush.bf16.msra.mxu0 0
    %154 = vmatpush.bf16.msra.mxu0 0
    %155 = vmatpush.bf16.msra.mxu0 0
    %156 = vmatpush.bf16.msra.mxu0 %v137
    %157 = vmatpush.bf16.msra.mxu0 %v135
    %158 = vmatpush.bf16.msra.mxu0 %v133
    %159 = vmatpush.bf16.msra.mxu0 %v131
    %160 = vmatpush.bf16.msra.mxu0 %v129
    %161 = vmatmul.bf16.gmra.mxu0 %v151
    %v162 = vpop.f32.mrf.mxu0
    %v163 = vadd.f32 %v95, %v162
    %v164 = vpop.f32.mrf.mxu0
    %165 = vdwg.mxu0
    %166 = vmatpush.bf16.msra.mxu0 0
    %167 = vmatpush.bf16.msra.mxu0 0
    %168 = vmatpush.bf16.msra.mxu0 0
    %169 = vmatpush.bf16.msra.mxu0 %v138
    %170 = vmatpush.bf16.msra.mxu0 %v136
    %171 = vmatpush.bf16.msra.mxu0 %v134
    %172 = vmatpush.bf16.msra.mxu0 %v132
    %173 = vmatpush.bf16.msra.mxu0 %v130
    %174 = vmatmul.bf16.gmra.mxu0 %v151
    %v175 = vpop.f32.mrf.mxu0
    %v176 = vadd.f32 %v96, %v175
    %v177 = vpop.f32.mrf.mxu0
    %178 = vdwg.mxu0
    %v179 = vmax.f32 %v163, 0.0
    %v180 = vmax.f32 %v176, 0.0
    %v181 = vpack.c.bf16 %v179, %v179
    %v182 = vpack.c.bf16 %v180, %v180
    %v183 = vld [vmem:[#allocation5] sm:$0xff]
    %v184 = vld [vmem:[#allocation5 + $0x8] sm:$0xff]
    %v185 = vld [vmem:[#allocation5 + $0x10] sm:$0xff]
    %v186 = vld [vmem:[#allocation5 + $0x18] sm:$0xff]
    %v187 = vld [vmem:[#allocation5 + $0x20] sm:$0xff]
    %v188 = vld [vmem:[#allocation5 + $0x28] sm:$0xff]
    %v189 = vld [vmem:[#allocation5 + $0x30] sm:$0xff]
    %v190 = vld [vmem:[#allocation5 + $0x38] sm:$0xff]
    %v191 = vld [vmem:[#allocation5 + $0x40] sm:$0xff]
    %v192 = vld [vmem:[#allocation5 + $0x48] sm:$0xff]
    %v193 = vld [vmem:[#allocation5 + $0x50] sm:$0xff]
    %v194 = vld [vmem:[#allocation5 + $0x58] sm:$0xff]
    %v195 = vld [vmem:[#allocation5 + $0x60] sm:$0xff]
    %v196 = vld [vmem:[#allocation5 + $0x68] sm:$0xff]
    %v197 = vld [vmem:[#allocation5 + $0x70] sm:$0xff]
    %v198 = vld [vmem:[#allocation5 + $0x78] sm:$0xff]
    %v199 = vld [vmem:[#allocation5 + $0x80] sm:$0xff]
    %v200 = vld [vmem:[#allocation5 + $0x88] sm:$0xff]
    %v201 = vld [vmem:[#allocation5 + $0x90] sm:$0xff]
    %v202 = vld [vmem:[#allocation5 + $0x98] sm:$0xff]
    %v203 = vld [vmem:[#allocation5 + $0xa0] sm:$0xff]
    %v204 = vld [vmem:[#allocation5 + $0xa8] sm:$0xff]
    %v205 = vld [vmem:[#allocation5 + $0xb0] sm:$0xff]
    %v206 = vld [vmem:[#allocation5 + $0xb8] sm:$0xff]
    %v207 = vld [vmem:[#allocation5 + $0xc0] sm:$0xff]
    %v208 = vld [vmem:[#allocation5 + $0xc8] sm:$0xff]
    %v209 = vld [vmem:[#allocation5 + $0xd0] sm:$0xff]
    %v210 = vld [vmem:[#allocation5 + $0xd8] sm:$0xff]
    %v211 = vld [vmem:[#allocation5 + $0xe0] sm:$0xff]
    %v212 = vld [vmem:[#allocation5 + $0xe8] sm:$0xff]
    %v213 = vld [vmem:[#allocation5 + $0xf0] sm:$0xff]
    %v214 = vld [vmem:[#allocation5 + $0xf8] sm:$0xff]
    %v215 = vld [vmem:[%s4] sm:$0x3]
    %v217 = vperm.slane %v215, 0
    %v218 = vperm.slane %v215, 1
    %v253 = vunpack.c.l.b16 %v183
    %v254 = vunpack.c.h.b16 %v183
    %v255 = vunpack.c.l.b16 %v184
    %v256 = vunpack.c.h.b16 %v184
    %v257 = vunpack.c.l.b16 %v185
    %v258 = vunpack.c.h.b16 %v185
    %v259 = vunpack.c.l.b16 %v186
    %v260 = vunpack.c.h.b16 %v186
    %v261 = vunpack.c.l.b16 %v187
    %v262 = vunpack.c.h.b16 %v187
    %v263 = vunpack.c.l.b16 %v188
    %v264 = vunpack.c.h.b16 %v188
    %v265 = vunpack.c.l.b16 %v189
    %v266 = vunpack.c.h.b16 %v189
    %v267 = vunpack.c.l.b16 %v190
    %v268 = vunpack.c.h.b16 %v190
    %v269 = vunpack.c.l.b16 %v191
    %v270 = vunpack.c.h.b16 %v191
    %v271 = vunpack.c.l.b16 %v192
    %v272 = vunpack.c.h.b16 %v192
    %v273 = vunpack.c.l.b16 %v193
    %v274 = vunpack.c.h.b16 %v193
    %v275 = vunpack.c.l.b16 %v194
    %v276 = vunpack.c.h.b16 %v194
    %v277 = vunpack.c.l.b16 %v195
    %v278 = vunpack.c.h.b16 %v195
    %v279 = vunpack.c.l.b16 %v196
    %v280 = vunpack.c.h.b16 %v196
    %v281 = vunpack.c.l.b16 %v197
    %v282 = vunpack.c.h.b16 %v197
    %v283 = vunpack.c.l.b16 %v198
    %v284 = vunpack.c.h.b16 %v198
    %v285 = vunpack.c.l.b16 %v199
    %v286 = vunpack.c.h.b16 %v199
    %v287 = vunpack.c.l.b16 %v200
    %v288 = vunpack.c.h.b16 %v200
    %v289 = vunpack.c.l.b16 %v201
    %v290 = vunpack.c.h.b16 %v201
    %v291 = vunpack.c.l.b16 %v202
    %v292 = vunpack.c.h.b16 %v202
    %v293 = vunpack.c.l.b16 %v203
    %v294 = vunpack.c.h.b16 %v203
    %v295 = vunpack.c.l.b16 %v204
    %v296 = vunpack.c.h.b16 %v204
    %v297 = vunpack.c.l.b16 %v205
    %v298 = vunpack.c.h.b16 %v205
    %v299 = vunpack.c.l.b16 %v206
    %v300 = vunpack.c.h.b16 %v206
    %v301 = vunpack.c.l.b16 %v207
    %v302 = vunpack.c.h.b16 %v207
    %v303 = vunpack.c.l.b16 %v208
    %v304 = vunpack.c.h.b16 %v208
    %v305 = vunpack.c.l.b16 %v209
    %v306 = vunpack.c.h.b16 %v209
    %v307 = vunpack.c.l.b16 %v210
    %v308 = vunpack.c.h.b16 %v210
    %v309 = vunpack.c.l.b16 %v211
    %v310 = vunpack.c.h.b16 %v211
    %v311 = vunpack.c.l.b16 %v212
    %v312 = vunpack.c.h.b16 %v212
    %v313 = vunpack.c.l.b16 %v213
    %v314 = vunpack.c.h.b16 %v213
    %v315 = vunpack.c.l.b16 %v214
    %v316 = vunpack.c.h.b16 %v214
    %v317 = vpack.c.b16 %v255, %v253
    %v318 = vpack.c.b16 %v256, %v254
    %v319 = vpack.c.b16 %v259, %v257
    %v320 = vpack.c.b16 %v260, %v258
    %v321 = vpack.c.b16 %v263, %v261
    %v322 = vpack.c.b16 %v264, %v262
    %v323 = vpack.c.b16 %v267, %v265
    %v324 = vpack.c.b16 %v268, %v266
    %v325 = vpack.c.b16 %v271, %v269
    %v326 = vpack.c.b16 %v272, %v270
    %v327 = vpack.c.b16 %v275, %v273
    %v328 = vpack.c.b16 %v276, %v274
    %v329 = vpack.c.b16 %v279, %v277
    %v330 = vpack.c.b16 %v280, %v278
    %v331 = vpack.c.b16 %v283, %v281
    %v332 = vpack.c.b16 %v284, %v282
    %v333 = vpack.c.b16 %v287, %v285
    %v334 = vpack.c.b16 %v288, %v286
    %v335 = vpack.c.b16 %v291, %v289
    %v336 = vpack.c.b16 %v292, %v290
    %v337 = vpack.c.b16 %v295, %v293
    %v338 = vpack.c.b16 %v296, %v294
    %v339 = vpack.c.b16 %v299, %v297
    %v340 = vpack.c.b16 %v300, %v298
    %v341 = vpack.c.b16 %v303, %v301
    %v342 = vpack.c.b16 %v304, %v302
    %v343 = vpack.c.b16 %v307, %v305
    %v344 = vpack.c.b16 %v308, %v306
    %v345 = vpack.c.b16 %v311, %v309
    %v346 = vpack.c.b16 %v312, %v310
    %v347 = vpack.c.b16 %v315, %v313
    %v348 = vpack.c.b16 %v316, %v314
    %381 = vmatpush.bf16.msra.mxu0 %v331
    %382 = vmatpush.bf16.msra.mxu0 %v329
    %383 = vmatpush.bf16.msra.mxu0 %v327
    %384 = vmatpush.bf16.msra.mxu0 %v325
    %385 = vmatpush.bf16.msra.mxu0 %v323
    %386 = vmatpush.bf16.msra.mxu0 %v321
    %387 = vmatpush.bf16.msra.mxu0 %v319
    %388 = vmatpush.bf16.msra.mxu0 %v317
    %389 = vmatmul.bf16.gmra.mxu0 %v181
    %v390 = vpop.f32.mrf.mxu0
    %v391 = vadd.f32 %v217, %v390
    %v392 = vpop.f32.mrf.mxu0
    %393 = vdwg.mxu0
    %394 = vmatpush.bf16.msra.mxu0 %v347
    %395 = vmatpush.bf16.msra.mxu0 %v345
    %396 = vmatpush.bf16.msra.mxu0 %v343
    %397 = vmatpush.bf16.msra.mxu0 %v341
    %398 = vmatpush.bf16.msra.mxu0 %v339
    %399 = vmatpush.bf16.msra.mxu0 %v337
    %400 = vmatpush.bf16.msra.mxu0 %v335
    %401 = vmatpush.bf16.msra.mxu0 %v333
    %402 = vmatmul.bf16.gmra.mxu0 %v182
    %v403 = vpop.f32.mrf.mxu0
    %v404 = vadd.f32 %v391, %v403
    %v405 = vpop.f32.mrf.mxu0
    %406 = vdwg.mxu0
    %407 = vmatpush.bf16.msra.mxu0 %v332
    %408 = vmatpush.bf16.msra.mxu0 %v330
    %409 = vmatpush.bf16.msra.mxu0 %v328
    %410 = vmatpush.bf16.msra.mxu0 %v326
    %411 = vmatpush.bf16.msra.mxu0 %v324
    %412 = vmatpush.bf16.msra.mxu0 %v322
    %413 = vmatpush.bf16.msra.mxu0 %v320
    %414 = vmatpush.bf16.msra.mxu0 %v318
    %415 = vmatmul.bf16.gmra.mxu0 %v181
    %v416 = vpop.f32.mrf.mxu0
    %v417 = vadd.f32 %v218, %v416
    %v418 = vpop.f32.mrf.mxu0
    %419 = vdwg.mxu0
    %420 = vmatpush.bf16.msra.mxu0 %v348
    %421 = vmatpush.bf16.msra.mxu0 %v346
    %422 = vmatpush.bf16.msra.mxu0 %v344
    %423 = vmatpush.bf16.msra.mxu0 %v342
    %424 = vmatpush.bf16.msra.mxu0 %v340
    %425 = vmatpush.bf16.msra.mxu0 %v338
    %426 = vmatpush.bf16.msra.mxu0 %v336
    %427 = vmatpush.bf16.msra.mxu0 %v334
    %428 = vmatmul.bf16.gmra.mxu0 %v182
    %v429 = vpop.f32.mrf.mxu0
    %v430 = vadd.f32 %v417, %v429
    %v431 = vpop.f32.mrf.mxu0
    %432 = vdwg.mxu0
    %v433 = vmax.f32 %v404, 0.0
    %v434 = vmax.f32 %v430, 0.0
    %v435 = vpack.c.bf16 %v433, %v433
    %v436 = vpack.c.bf16 %v434, %v434
    %v437 = vld [vmem:[#allocation7] sm:$0xf]
    %v438 = vld [vmem:[#allocation7 + $0x4] sm:$0xf]
    %v439 = vld [vmem:[#allocation7 + $0x8] sm:$0xf]
    %v440 = vld [vmem:[#allocation7 + $0xc] sm:$0xf]
    %v441 = vld [vmem:[#allocation7 + $0x10] sm:$0xf]
    %v442 = vld [vmem:[#allocation7 + $0x14] sm:$0xf]
    %v443 = vld [vmem:[#allocation7 + $0x18] sm:$0xf]
    %v444 = vld [vmem:[#allocation7 + $0x1c] sm:$0xf]
    %v445 = vld [vmem:[#allocation7 + $0x20] sm:$0xf]
    %v446 = vld [vmem:[#allocation7 + $0x24] sm:$0xf]
    %v447 = vld [vmem:[#allocation7 + $0x28] sm:$0xf]
    %v448 = vld [vmem:[#allocation7 + $0x2c] sm:$0xf]
    %v449 = vld [vmem:[#allocation7 + $0x30] sm:$0xf]
    %v450 = vld [vmem:[#allocation7 + $0x34] sm:$0xf]
    %v451 = vld [vmem:[#allocation7 + $0x38] sm:$0xf]
    %v452 = vld [vmem:[#allocation7 + $0x3c] sm:$0xf]
    %v453 = vld [vmem:[#allocation7 + $0x40] sm:$0xf]
    %v454 = vld [vmem:[#allocation7 + $0x44] sm:$0xf]
    %v455 = vld [vmem:[#allocation7 + $0x48] sm:$0xf]
    %v456 = vld [vmem:[#allocation7 + $0x4c] sm:$0xf]
    %v457 = vld [vmem:[#allocation7 + $0x50] sm:$0xf]
    %v458 = vld [vmem:[#allocation7 + $0x54] sm:$0xf]
    %v459 = vld [vmem:[#allocation7 + $0x58] sm:$0xf]
    %v460 = vld [vmem:[#allocation7 + $0x5c] sm:$0xf]
    %v461 = vld [vmem:[#allocation7 + $0x60] sm:$0xf]
    %v462 = vld [vmem:[#allocation7 + $0x64] sm:$0xf]
    %v463 = vld [vmem:[#allocation7 + $0x68] sm:$0xf]
    %v464 = vld [vmem:[#allocation7 + $0x6c] sm:$0xf]
    %v465 = vld [vmem:[#allocation7 + $0x70] sm:$0xf]
    %v466 = vld [vmem:[#allocation7 + $0x74] sm:$0xf]
    %v467 = vld [vmem:[#allocation7 + $0x78] sm:$0xf]
    %v468 = vld [vmem:[#allocation7 + $0x7c] sm:$0xf]
    %v469 = vld [vmem:[%s6] sm:$0x1]
    %v471 = vperm.slane %v469, 0
    %v505 = vunpack.c.l.b16 %v437
    %v506 = vunpack.c.l.b16 %v438
    %v507 = vunpack.c.l.b16 %v439
    %v508 = vunpack.c.l.b16 %v440
    %v509 = vunpack.c.l.b16 %v441
    %v510 = vunpack.c.l.b16 %v442
    %v511 = vunpack.c.l.b16 %v443
    %v512 = vunpack.c.l.b16 %v444
    %v513 = vunpack.c.l.b16 %v445
    %v514 = vunpack.c.l.b16 %v446
    %v515 = vunpack.c.l.b16 %v447
    %v516 = vunpack.c.l.b16 %v448
    %v517 = vunpack.c.l.b16 %v449
    %v518 = vunpack.c.l.b16 %v450
    %v519 = vunpack.c.l.b16 %v451
    %v520 = vunpack.c.l.b16 %v452
    %v521 = vunpack.c.l.b16 %v453
    %v522 = vunpack.c.l.b16 %v454
    %v523 = vunpack.c.l.b16 %v455
    %v524 = vunpack.c.l.b16 %v456
    %v525 = vunpack.c.l.b16 %v457
    %v526 = vunpack.c.l.b16 %v458
    %v527 = vunpack.c.l.b16 %v459
    %v528 = vunpack.c.l.b16 %v460
    %v529 = vunpack.c.l.b16 %v461
    %v530 = vunpack.c.l.b16 %v462
    %v531 = vunpack.c.l.b16 %v463
    %v532 = vunpack.c.l.b16 %v464
    %v533 = vunpack.c.l.b16 %v465
    %v534 = vunpack.c.l.b16 %v466
    %v535 = vunpack.c.l.b16 %v467
    %v536 = vunpack.c.l.b16 %v468
    %v537 = vpack.c.b16 %v506, %v505
    %v538 = vpack.c.b16 %v508, %v507
    %v539 = vpack.c.b16 %v510, %v509
    %v540 = vpack.c.b16 %v512, %v511
    %v541 = vpack.c.b16 %v514, %v513
    %v542 = vpack.c.b16 %v516, %v515
    %v543 = vpack.c.b16 %v518, %v517
    %v544 = vpack.c.b16 %v520, %v519
    %v545 = vpack.c.b16 %v522, %v521
    %v546 = vpack.c.b16 %v524, %v523
    %v547 = vpack.c.b16 %v526, %v525
    %v548 = vpack.c.b16 %v528, %v527
    %v549 = vpack.c.b16 %v530, %v529
    %v550 = vpack.c.b16 %v532, %v531
    %v551 = vpack.c.b16 %v534, %v533
    %v552 = vpack.c.b16 %v536, %v535
    %569 = vmatpush.bf16.msra.mxu0 %v544
    %570 = vmatpush.bf16.msra.mxu0 %v543
    %571 = vmatpush.bf16.msra.mxu0 %v542
    %572 = vmatpush.bf16.msra.mxu0 %v541
    %573 = vmatpush.bf16.msra.mxu0 %v540
    %574 = vmatpush.bf16.msra.mxu0 %v539
    %575 = vmatpush.bf16.msra.mxu0 %v538
    %576 = vmatpush.bf16.msra.mxu0 %v537
    %577 = vmatmul.bf16.gmra.mxu0 %v435
    %v578 = vpop.f32.mrf.mxu0
    %v579 = vadd.f32 %v471, %v578
    %v580 = vpop.f32.mrf.mxu0
    %581 = vdwg.mxu0
    %582 = vmatpush.bf16.msra.mxu0 %v552
    %583 = vmatpush.bf16.msra.mxu0 %v551
    %584 = vmatpush.bf16.msra.mxu0 %v550
    %585 = vmatpush.bf16.msra.mxu0 %v549
    %586 = vmatpush.bf16.msra.mxu0 %v548
    %587 = vmatpush.bf16.msra.mxu0 %v547
    %588 = vmatpush.bf16.msra.mxu0 %v546
    %589 = vmatpush.bf16.msra.mxu0 %v545
    %590 = vmatmul.bf16.gmra.mxu0 %v436
    %v591 = vpop.f32.mrf.mxu0
    %v592 = vadd.f32 %v579, %v591
    %v593 = vpop.f32.mrf.mxu0
    %594 = vdwg.mxu0
    %v595 = vmax.f32 %v592, 0.0
    %v596 = vpack.c.bf16 %v595, %v595
    %v597 = vld [vmem:[%s7] sm:$0xf]
    %v598 = vld [vmem:[%s7 + $0x4] sm:$0xf]
    %v599 = vld [vmem:[%s7 + $0x8] sm:$0xf]
    %v600 = vld [vmem:[%s7 + $0xc] sm:$0xf]
    %v601 = vld [vmem:[%s7 + $0x10] sm:$0xf]
    %v602 = vld [vmem:[%s7 + $0x14] sm:$0xf]
    %v603 = vld [vmem:[%s7 + $0x18] sm:$0xf]
    %v604 = vld [vmem:[%s7 + $0x1c] sm:$0xf]
    %v605 = vld [vmem:[%s7 + $0x20] sm:$0xf]
    %v606 = vld [vmem:[%s7 + $0x24] sm:$0xf]
    %v607 = vld [vmem:[%s7 + $0x28] sm:$0xf]
    %v608 = vld [vmem:[%s7 + $0x2c] sm:$0xf]
    %v609 = vld [vmem:[%s7 + $0x30] sm:$0xf]
    %v610 = vld [vmem:[%s7 + $0x34] sm:$0xf]
    %v611 = vld [vmem:[%s7 + $0x38] sm:$0xf]
    %v612 = vld [vmem:[%s7 + $0x3c] sm:$0xf]
    %v613 = vld [vmem:[%s8] sm:$0x1]
    %v615 = vperm.slane %v613, 0
    %v633 = vunpack.c.l.b16 %v597
    %v634 = vunpack.c.l.b16 %v598
    %v635 = vunpack.c.l.b16 %v599
    %v636 = vunpack.c.l.b16 %v600
    %v637 = vunpack.c.l.b16 %v601
    %v638 = vunpack.c.l.b16 %v602
    %v639 = vunpack.c.l.b16 %v603
    %v640 = vunpack.c.l.b16 %v604
    %v641 = vunpack.c.l.b16 %v605
    %v642 = vunpack.c.l.b16 %v606
    %v643 = vunpack.c.l.b16 %v607
    %v644 = vunpack.c.l.b16 %v608
    %v645 = vunpack.c.l.b16 %v609
    %v646 = vunpack.c.l.b16 %v610
    %v647 = vunpack.c.l.b16 %v611
    %v648 = vunpack.c.l.b16 %v612
    %v649 = vpack.c.b16 %v634, %v633
    %v650 = vpack.c.b16 %v636, %v635
    %v651 = vpack.c.b16 %v638, %v637
    %v652 = vpack.c.b16 %v640, %v639
    %v653 = vpack.c.b16 %v642, %v641
    %v654 = vpack.c.b16 %v644, %v643
    %v655 = vpack.c.b16 %v646, %v645
    %v656 = vpack.c.b16 %v648, %v647
    %665 = vmatpush.bf16.msra.mxu0 %v656
    %666 = vmatpush.bf16.msra.mxu0 %v655
    %667 = vmatpush.bf16.msra.mxu0 %v654
    %668 = vmatpush.bf16.msra.mxu0 %v653
    %669 = vmatpush.bf16.msra.mxu0 %v652
    %670 = vmatpush.bf16.msra.mxu0 %v651
    %671 = vmatpush.bf16.msra.mxu0 %v650
    %672 = vmatpush.bf16.msra.mxu0 %v649
    %673 = vmatmul.bf16.gmra.mxu0 %v596
    %v674 = vpop.f32.mrf.mxu0
    %v675 = vadd.f32 %v615, %v674
    %v676 = vpop.f32.mrf.mxu0
    %677 = vdwg.mxu0
    %vm678 = vcmask 138240
    %679 = vst.msk [vmem:[#allocation8] sm:$0xff] %vm678, %v675
    // Predicated region
    $region50: #{_forward_impl.1} parent=1 // pred_check
      _
    $region51: #{_forward_impl.1} parent=1 // pred_check_branch
      %681 = sbr.rel (0) target = $region53
    $region52: #{_forward_impl.1} parent=1 // pred_region
      %683 = vsyncadd [#allocation4], 0
      %s685 = sshll.u32 [#allocation8], 4
      %s686 = int_to_ptr.vmem [resolvable:$true] %s685
      %s687 = sshll.u32 %s9, 4
      %s688 = int_to_ptr.hbm [resolvable:$true] %s687
      %690 = dma.vmem_to_hbm [thread:$0]  %s686, 128, %s688, [#allocation4]
    $region53: #{_forward_impl.1} parent=1 // pred_fallthru
      _
    // Predicated region
    $region54: #{_forward_impl.1} parent=1 // pred_check
      _
    $region55: #{_forward_impl.1} parent=1 // pred_check_branch
      %692 = sbr.rel (0) target = $region57
    $region56: #{_forward_impl.1} parent=1 // pred_region
      %694 = dma.done [#allocation4], 128
    $region57: #{_forward_impl.1} parent=1 // pred_fallthru
      _
    %695 = vsyncpa [#allocation3], 1
    %696 = vsyncpa [#allocation6], 1
    %697 = vsyncpa [#allocation4], 1

</llo_original>
